<compile_context>
chip_gen: v7x
topology: tpu7x:2x2x1
jax: 0.10.0
libtpu: 0.0.40
codegen_flags: <defaults>
</compile_context>

<pallas_src>
import functools

import jax
import jax.numpy as jnp
from jax.experimental import pallas as pl
from jax.experimental.pallas import tpu as pltpu

F32 = jnp.float32
BF16 = jnp.bfloat16
_VMEM = pltpu.MemorySpace.VMEM


def _row_tile(m, cap=512):
    """Largest row tile that divides m and is a multiple of 8 (or m itself)."""
    if m <= cap:
        return m
    t = cap - (cap % 8)
    while t >= 8:
        if m % t == 0:
            return t
        t -= 8
    return m


# ----------------------------------------------------------------------------
# BatchNorm (train-mode batch statistics) -> per-channel scale/shift
# ----------------------------------------------------------------------------
def _bn_stats_kernel(x_ref, o_ref):
    @pl.when(pl.program_id(0) == 0)
    def _():
        o_ref[...] = jnp.zeros_like(o_ref)

    x = x_ref[...]
    s = jnp.concatenate(
        [jnp.sum(x, axis=0, keepdims=True),
         jnp.sum(x * x, axis=0, keepdims=True)], axis=0)
    o_ref[...] += s


def bn_scale_shift(x2d, gamma, beta, eps=1e-5):
    """Returns (a, b) with bn(x) == a * x + b (train-mode, biased variance)."""
    m, c = x2d.shape
    tm = _row_tile(m)
    stats = pl.pallas_call(
        _bn_stats_kernel,
        out_shape=jax.ShapeDtypeStruct((2, c), F32),
        grid=(m // tm,),
        in_specs=[pl.BlockSpec((tm, c), lambda i: (i, 0))],
        out_specs=pl.BlockSpec((2, c), lambda i: (0, 0)),
        compiler_params=pltpu.CompilerParams(dimension_semantics=("arbitrary",)),
    )(x2d)
    mean = stats[0] / m
    var = jnp.maximum(stats[1] / m - mean * mean, 0.0)
    a = gamma * jax.lax.rsqrt(var + eps)
    b = beta - mean * a
    return a.reshape(1, c), b.reshape(1, c)


# ----------------------------------------------------------------------------
# Fused (scale/shift) + [ReLU] + matmul + bias + [ReLU]   (1x1 convs / stem)
# ----------------------------------------------------------------------------
def _affine_matmul_kernel(x_ref, a_ref, b_ref, w_ref, bias_ref, o_ref,
                          *, scale, pre_relu, post_relu):
    x = x_ref[...]
    if scale:
        x = x * a_ref[...] + b_ref[...]
    if pre_relu:
        x = jnp.maximum(x, 0.0)
    y = jnp.dot(x.astype(BF16), w_ref[...], preferred_element_type=F32)
    y = y + bias_ref[...]
    if post_relu:
        y = jnp.maximum(y, 0.0)
    o_ref[...] = y


def affine_matmul(x2d, w, bias, a=None, b=None, pre_relu=False, post_relu=False):
    m, cin = x2d.shape
    cout = w.shape[1]
    scale = a is not None
    if a is None:
        a = jnp.ones((1, cin), F32)
        b = jnp.zeros((1, cin), F32)
    tm = _row_tile(m)
    return pl.pallas_call(
        functools.partial(_affine_matmul_kernel, scale=scale,
                          pre_relu=pre_relu, post_relu=post_relu),
        out_shape=jax.ShapeDtypeStruct((m, cout), F32),
        grid=(m // tm,),
        in_specs=[
            pl.BlockSpec((tm, cin), lambda i: (i, 0)),
            pl.BlockSpec((1, cin), lambda i: (0, 0)),
            pl.BlockSpec((1, cin), lambda i: (0, 0)),
            pl.BlockSpec((cin, cout), lambda i: (0, 0)),
            pl.BlockSpec((1, cout), lambda i: (0, 0)),
        ],
        out_specs=pl.BlockSpec((tm, cout), lambda i: (i, 0)),
        compiler_params=pltpu.CompilerParams(dimension_semantics=("parallel",)),
    )(x2d, a, b, w.astype(BF16), bias.reshape(1, cout))


# ----------------------------------------------------------------------------
# Fused BN-apply + ReLU (stem only)
# ----------------------------------------------------------------------------
def _affine_relu_kernel(x_ref, a_ref, b_ref, o_ref):
    o_ref[...] = jnp.maximum(x_ref[...] * a_ref[...] + b_ref[...], 0.0)


def affine_relu(x2d, a, b):
    m, c = x2d.shape
    tm = _row_tile(m)
    return pl.pallas_call(
        _affine_relu_kernel,
        out_shape=jax.ShapeDtypeStruct((m, c), F32),
        grid=(m // tm,),
        in_specs=[pl.BlockSpec((tm, c), lambda i: (i, 0)),
                  pl.BlockSpec((1, c), lambda i: (0, 0)),
                  pl.BlockSpec((1, c), lambda i: (0, 0))],
        out_specs=pl.BlockSpec((tm, c), lambda i: (i, 0)),
        compiler_params=pltpu.CompilerParams(dimension_semantics=("parallel",)),
    )(x2d, a, b)


# ----------------------------------------------------------------------------
# Fused BN + 3x3 conv (pad=1) + bias + ReLU, per-image, taps accumulated in VMEM
# ----------------------------------------------------------------------------
def _conv3x3_kernel(x_ref, a_ref, b_ref, w_ref, bias_ref, o_ref, xpad_ref,
                    *, H, W, Cin, Cout):
    # Zero the padded scratch (borders stay 0 == PyTorch zero padding applied
    # AFTER BatchNorm), then write the normalized interior.
    xpad_ref[...] = jnp.zeros_like(xpad_ref)
    xn = x_ref[0] * a_ref[...] + b_ref[...]          # BN scale/shift in f32
    xpad_ref[1:H + 1, 1:W + 1, :] = xn

    acc = jnp.zeros((H * W, Cout), F32)
    for i in range(3):
        for j in range(3):
            tap = xpad_ref[i:i + H, j:j + W, :].reshape(H * W, Cin)
            acc = acc + jnp.dot(tap.astype(BF16), w_ref[i * 3 + j],
                                preferred_element_type=F32)
    y = jnp.maximum(acc + bias_ref[...], 0.0)        # bias + ReLU
    o_ref[0] = y.reshape(H, W, Cout)


def dense_conv3x3(x, a, b, wm, bias):
    n, h, w_, cin = x.shape
    cout = wm.shape[-1]
    kern = functools.partial(_conv3x3_kernel, H=h, W=w_, Cin=cin, Cout=cout)
    return pl.pallas_call(
        kern,
        out_shape=jax.ShapeDtypeStruct((n, h, w_, cout), F32),
        grid=(n,),
        in_specs=[
            pl.BlockSpec((1, h, w_, cin), lambda i: (i, 0, 0, 0)),
            pl.BlockSpec((1, cin), lambda i: (0, 0)),
            pl.BlockSpec((1, cin), lambda i: (0, 0)),
            pl.BlockSpec((9, cin, cout), lambda i: (0, 0, 0)),
            pl.BlockSpec((1, cout), lambda i: (0, 0)),
        ],
        out_specs=pl.BlockSpec((1, h, w_, cout), lambda i: (i, 0, 0, 0)),
        scratch_shapes=[pltpu.VMEM((h + 2, w_ + 2, cin), F32)],
        compiler_params=pltpu.CompilerParams(dimension_semantics=("parallel",)),
    )(x, a, b, wm, bias.reshape(1, cout))


# ----------------------------------------------------------------------------
# Transition: BN + ReLU + AvgPool2x2 + 1x1 conv, fully fused (pool commutes
# with the 1x1 conv, so we average the 4 normalized/ReLU'd taps pre-matmul).
# ----------------------------------------------------------------------------
def _transition_kernel(x0_ref, x1_ref, x2_ref, x3_ref, a_ref, b_ref,
                       w_ref, bias_ref, o_ref):
    a = a_ref[...]
    b = b_ref[...]
    acc = None
    for r in (x0_ref, x1_ref, x2_ref, x3_ref):
        t = jnp.maximum(r[...] * a + b, 0.0)          # BN -> ReLU per tap
        acc = t if acc is None else acc + t
    pooled = acc * 0.25                               # AvgPool2d(2, 2)
    o_ref[...] = jnp.dot(pooled.astype(BF16), w_ref[...],
                         preferred_element_type=F32) + bias_ref[...]


def transition(x, blk):
    n, h, w_, c = x.shape
    ho, wo = h // 2, w_ // 2
    wm = blk["conv"]["wm"]
    cout = wm.shape[1]
    a, b = bn_scale_shift(x.reshape(n * h * w_, c),
                          blk["bn"]["gamma"], blk["bn"]["beta"])
    taps = [x[:, di::2, dj::2, :].reshape(n * ho * wo, c)
            for di in range(2) for dj in range(2)]
    mp = n * ho * wo
    tm = _row_tile(mp)
    y = pl.pallas_call(
        _transition_kernel,
        out_shape=jax.ShapeDtypeStruct((mp, cout), F32),
        grid=(mp // tm,),
        in_specs=[pl.BlockSpec((tm, c), lambda i: (i, 0))] * 4 + [
            pl.BlockSpec((1, c), lambda i: (0, 0)),
            pl.BlockSpec((1, c), lambda i: (0, 0)),
            pl.BlockSpec((c, cout), lambda i: (0, 0)),
            pl.BlockSpec((1, cout), lambda i: (0, 0)),
        ],
        out_specs=pl.BlockSpec((tm, cout), lambda i: (i, 0)),
        compiler_params=pltpu.CompilerParams(dimension_semantics=("parallel",)),
    )(*taps, a, b, wm, blk["conv"]["b"].reshape(1, cout))
    return y.reshape(n, ho, wo, cout)


# ----------------------------------------------------------------------------
# MaxPool 3x3 / stride 2 / pad 1 as an elementwise max over 9 tap views.
# Input is post-ReLU (>= 0) so zero padding is equivalent to -inf padding.
# ----------------------------------------------------------------------------
def _maxpool_kernel(*refs):
    o_ref = refs[-1]
    m = refs[0][...]
    for r in refs[1:-1]:
        m = jnp.maximum(m, r[...])
    o_ref[...] = m


def maxpool3x3_s2_p1(x):
    n, h, w_, c = x.shape
    ho = (h + 2 - 3) // 2 + 1
    wo = (w_ + 2 - 3) // 2 + 1
    xp = jnp.pad(x, ((0, 0), (1, 1), (1, 1), (0, 0)))
    taps = [xp[:, i:i + 2 * ho:2, j:j + 2 * wo:2, :].reshape(n * ho * wo, c)
            for i in range(3) for j in range(3)]
    m = n * ho * wo
    tm = _row_tile(m)
    y = pl.pallas_call(
        _maxpool_kernel,
        out_shape=jax.ShapeDtypeStruct((m, c), F32),
        grid=(m // tm,),
        in_specs=[pl.BlockSpec((tm, c), lambda i: (i, 0))] * 9,
        out_specs=pl.BlockSpec((tm, c), lambda i: (i, 0)),
        compiler_params=pltpu.CompilerParams(dimension_semantics=("parallel",)),
    )(*taps)
    return y.reshape(n, ho, wo, c)


# ----------------------------------------------------------------------------
# Head: global average pool + Linear, fused.
# ----------------------------------------------------------------------------
def _head_kernel(x_ref, w_ref, bias_ref, o_ref):
    pooled = jnp.mean(x_ref[...], axis=1)             # AdaptiveAvgPool2d((1,1))
    o_ref[...] = jnp.dot(pooled.astype(BF16), w_ref[...],
                         preferred_element_type=F32) + bias_ref[...]


def head(x, blk):
    n, h, w_, c = x.shape
    cout = blk["wm"].shape[1]
    return pl.pallas_call(
        _head_kernel,
        out_shape=jax.ShapeDtypeStruct((n, cout), F32),
        in_specs=[pl.BlockSpec(memory_space=_VMEM)] * 3,
        out_specs=pl.BlockSpec(memory_space=_VMEM),
    )(x.reshape(n, h * w_, c), blk["wm"], blk["b"].reshape(1, cout))


# ----------------------------------------------------------------------------
# Stem: Conv7x7/2 (Cin=1 via small JAX-side im2col) -> BN -> ReLU -> MaxPool.
# ----------------------------------------------------------------------------
def _im2col(x, kh, kw, stride, pad):
    n, h, w_, c = x.shape
    ho = (h + 2 * pad - kh) // stride + 1
    wo = (w_ + 2 * pad - kw) // stride + 1
    xp = jnp.pad(x, ((0, 0), (pad, pad), (pad, pad), (0, 0)))
    cols = [xp[:, i:i + stride * ho:stride, j:j + stride * wo:stride, :]
            for i in range(kh) for j in range(kw)]
    cols = jnp.concatenate(cols, axis=-1)             # taps outer, channels inner
    return cols.reshape(n * ho * wo, kh * kw * c), (n, ho, wo)


def stem(x, p):
    cols, (n, ho, wo) = _im2col(x, 7, 7, 2, 3)
    y = affine_matmul(cols, p["conv"]["wm"], p["conv"]["b"])
    a, b = bn_scale_shift(y, p["bn"]["gamma"], p["bn"]["beta"])
    y = affine_relu(y, a, b)
    return maxpool3x3_s2_p1(y.reshape(n, ho, wo, 64))


# ----------------------------------------------------------------------------
# Dense layer (conv_blk): BN -> Conv1x1 -> ReLU -> BN -> Conv3x3(pad1) -> ReLU
# ----------------------------------------------------------------------------
def dense_layer(x, cp):
    n, h, w_, c = x.shape
    x2 = x.reshape(n * h * w_, c)
    a1, b1 = bn_scale_shift(x2, cp["bn1"]["gamma"], cp["bn1"]["beta"])
    z2 = affine_matmul(x2, cp["conv1"]["wm"], cp["conv1"]["b"],
                       a=a1, b=b1, post_relu=True)
    a2, b2 = bn_scale_shift(z2, cp["bn2"]["gamma"], cp["bn2"]["beta"])
    z = z2.reshape(n, h, w_, c)
    return dense_conv3x3(z, a2, b2, cp["conv2"]["wm"], cp["conv2"]["b"])


# ----------------------------------------------------------------------------
# Full forward (mirrors the PyTorch module structure)
# ----------------------------------------------------------------------------
def densenet_forward(params, x_nchw):
    x = jnp.transpose(x_nchw, (0, 2, 3, 1)).astype(F32)   # NCHW -> NHWC
    x = stem(x, params["stem"])
    for blk in params["body"]:
        kind = blk["kind"]
        if kind == "dense":
            for cp in blk["convs"]:
                y = dense_layer(x, cp)
                x = jnp.concatenate([x, y], axis=-1)
        elif kind == "transition":
            x = transition(x, blk)
        else:                                              # head
            return head(x, blk)
    return x


# ----------------------------------------------------------------------------
# Deterministic parameter initialization (weights pre-laid-out for the kernels)
# ----------------------------------------------------------------------------
def _init_bn(key, c):
    k1, k2 = jax.random.split(key)
    return {"gamma": 1.0 + 0.1 * jax.random.normal(k1, (c,), F32),
            "beta": 0.1 * jax.random.normal(k2, (c,), F32)}


def _init_conv1x1(key, cin, cout):
    kw_, kb_ = jax.random.split(key)
    w = jax.random.normal(kw_, (cin, cout), F32) / (cin ** 0.5)
    return {"wm": w.astype(BF16),
            "b": 0.01 * jax.random.normal(kb_, (cout,), F32)}


def _init_conv3x3(key, cin, cout):
    kw_, kb_ = jax.random.split(key)
    w = jax.random.normal(kw_, (3, 3, cin, cout), F32) / ((9 * cin) ** 0.5)
    return {"wm": w.reshape(9, cin, cout).astype(BF16),
            "b": 0.01 * jax.random.normal(kb_, (cout,), F32)}


def _init_conv7x7(key, cout):
    kw_, kb_ = jax.random.split(key)
    w = jax.random.normal(kw_, (7, 7, 1, cout), F32) / (49.0 ** 0.5)
    return {"wm": w.reshape(49, cout).astype(BF16),
            "b": 0.01 * jax.random.normal(kb_, (cout,), F32)}


def init_densenet_params(arch_cfg, key):
    keys = iter(jax.random.split(key, 4096))
    params = {"stem": {"conv": _init_conv7x7(next(keys), 64),
                       "bn": _init_bn(next(keys), 64)},
              "body": []}
    in_c = 64
    n_stages = len(arch_cfg)
    for i, (num_convs, k) in enumerate(arch_cfg):
        convs = []
        for j in range(num_convs):
            c = in_c + k * j
            convs.append({"bn1": _init_bn(next(keys), c),
                          "conv1": _init_conv1x1(next(keys), c, c),
                          "bn2": _init_bn(next(keys), c),
                          "conv2": _init_conv3x3(next(keys), c, k)})
        params["body"].append({"kind": "dense", "convs": convs})
        in_c += num_convs * k
        if i == n_stages - 1:   # PyTorch `i == 3` branch: global pool + Linear
            kw_, kb_ = jax.random.split(next(keys))
            params["body"].append({
                "kind": "head",
                "wm": (jax.random.normal(kw_, (in_c, 10), F32)
                       / (in_c ** 0.5)).astype(BF16),
                "b": 0.01 * jax.random.normal(kb_, (10,), F32)})
        else:
            params["body"].append({"kind": "transition",
                                   "bn": _init_bn(next(keys), in_c),
                                   "conv": _init_conv1x1(next(keys), in_c,
                                                         in_c // 2)})
            in_c //= 2
    return params


if __name__ == "__main__":
    key = jax.random.PRNGKey(0)
    pkey, xkey = jax.random.split(key)

    # Small 4-stage DenseNet configuration: (num_convs, growth_rate) per stage.
    ARCH = [(2, 16), (2, 16), (2, 16), (2, 16)]
    params = init_densenet_params(ARCH, pkey)

    # PyTorch-convention NCHW input with 1 channel (as the stem expects).
    x = jax.random.normal(xkey, (2, 1, 64, 64), F32)

    out = densenet_forward(params, x)
    out = jax.block_until_ready(out)
    assert out.shape == (2, 10) and out.dtype == jnp.float32
    assert bool(jnp.all(jnp.isfinite(out)))
    print("KERNEL_OK")
</pallas_src>

<mosaic_0001>
module attributes {stable_mosaic.version = 11 : i64} {
  func.func @_affine_matmul_kernel(%arg0: i32, %arg1: memref<512x49xf32, #tpu.memory_space<vmem>>, %arg2: memref<1x49xf32, #tpu.memory_space<vmem>>, %arg3: memref<1x49xf32, #tpu.memory_space<vmem>>, %arg4: memref<49x64xbf16, #tpu.memory_space<vmem>>, %arg5: memref<1x64xf32, #tpu.memory_space<vmem>>, %arg6: memref<512x64xf32, #tpu.memory_space<vmem>>) attributes {dimension_semantics = [#tpu.dimension_semantics<parallel>], iteration_bounds = array<i64: 4>, scalar_prefetch = 0 : i64, scratch_operands = 0 : i64, tpu.core_type = #tpu.core_type<tc>, window_params = [{transform_indices = @transform_0, window_bounds = array<i64: 512, 49>}, {pipeline_mode = #tpu.pipeline_mode<synchronous>, transform_indices = @transform_1, window_bounds = array<i64: 1, 49>}, {pipeline_mode = #tpu.pipeline_mode<synchronous>, transform_indices = @transform_2, window_bounds = array<i64: 1, 49>}, {pipeline_mode = #tpu.pipeline_mode<synchronous>, transform_indices = @transform_3, window_bounds = array<i64: 49, 64>}, {pipeline_mode = #tpu.pipeline_mode<synchronous>, transform_indices = @transform_4, window_bounds = array<i64: 1, 64>}, {transform_indices = @transform_5, window_bounds = array<i64: 512, 64>}]} {
    %c0 = arith.constant 0 : index
    %c0_0 = arith.constant 0 : index
    %0 = vector.load %arg1[%c0, %c0_0] : memref<512x49xf32, #tpu.memory_space<vmem>>, vector<512x49xf32>
    %1 = arith.truncf %0 : vector<512x49xf32> to vector<512x49xbf16>
    %c0_1 = arith.constant 0 : index
    %c0_2 = arith.constant 0 : index
    %2 = vector.load %arg4[%c0_1, %c0_2] : memref<49x64xbf16, #tpu.memory_space<vmem>>, vector<49x64xbf16>
    %cst = arith.constant dense<0.000000e+00> : vector<512x64xf32>
    %3 = tpu.matmul %1, %2, %cst {dimension_numbers = #tpu.dot_dimension_numbers<[1], [0], [0], [1], [0, 0, 1, 1], [], []>} : vector<512x49xbf16>, vector<49x64xbf16>, vector<512x64xf32> -> vector<512x64xf32>
    %c0_3 = arith.constant 0 : index
    %c0_4 = arith.constant 0 : index
    %4 = vector.load %arg5[%c0_3, %c0_4] : memref<1x64xf32, #tpu.memory_space<vmem>>, vector<1x64xf32>
    %5 = vector.broadcast %4 : vector<1x64xf32> to vector<512x64xf32>
    %6 = arith.addf %3, %5 : vector<512x64xf32>
    %c0_5 = arith.constant 0 : index
    %c0_6 = arith.constant 0 : index
    %7 = vector.load %arg6[%c0_5, %c0_6] : memref<512x64xf32, #tpu.memory_space<vmem>>, vector<512x64xf32>
    tpu.vector_store %arg6[%c0_5, %c0_6], %6 {strides = array<i32>} : memref<512x64xf32, #tpu.memory_space<vmem>>, vector<512x64xf32>,
    return
  }
  func.func @transform_0(%arg0: i32) -> (i32, i32) {
    %c0_i32 = arith.constant 0 : i32
    %c0_i32_0 = arith.constant 0 : i32
    return %arg0, %c0_i32 : i32, i32
  }
  func.func @transform_1(%arg0: i32) -> (i32, i32) {
    %c0_i32 = arith.constant 0 : i32
    %c0_i32_0 = arith.constant 0 : i32
    %c0_i32_1 = arith.constant 0 : i32
    return %c0_i32, %c0_i32_0 : i32, i32
  }
  func.func @transform_2(%arg0: i32) -> (i32, i32) {
    %c0_i32 = arith.constant 0 : i32
    %c0_i32_0 = arith.constant 0 : i32
    %c0_i32_1 = arith.constant 0 : i32
    return %c0_i32, %c0_i32_0 : i32, i32
  }
  func.func @transform_3(%arg0: i32) -> (i32, i32) {
    %c0_i32 = arith.constant 0 : i32
    %c0_i32_0 = arith.constant 0 : i32
    %c0_i32_1 = arith.constant 0 : i32
    return %c0_i32, %c0_i32_0 : i32, i32
  }
  func.func @transform_4(%arg0: i32) -> (i32, i32) {
    %c0_i32 = arith.constant 0 : i32
    %c0_i32_0 = arith.constant 0 : i32
    %c0_i32_1 = arith.constant 0 : i32
    return %c0_i32, %c0_i32_0 : i32, i32
  }
  func.func @transform_5(%arg0: i32) -> (i32, i32) {
    %c0_i32 = arith.constant 0 : i32
    %c0_i32_0 = arith.constant 0 : i32
    return %arg0, %c0_i32 : i32, i32
  }
}

</mosaic_0001>

<llo_original>
// kernel: tpu_custom_call.1
$region0: #{tpu_custom_call.1}
  #allocation0 [shape = 'u32[]', space=smem, size = 0x4, offset = 0x4, fixed_abs, tag = 'smem constant byte address 0x4 - core index']
  #allocation1 [shape = 'u32[144,128]{1,0:T(1,128)}', space=vmem, size = 0x12000, scoped, tag = 'internal scratch']
  %s0 = inlined_call_operand.vmem [shape: f32[2048,49], index: 0, kind: input, shape index: {}]
  %s1 = inlined_call_operand.vmem [shape: f32[1,49], index: 1, kind: input, shape index: {}]
  %s2 = inlined_call_operand.vmem [shape: f32[1,49], index: 2, kind: input, shape index: {}]
  %s3 = inlined_call_operand.vmem [shape: bf16[49,64], index: 3, kind: input, shape index: {}]
  %s4 = inlined_call_operand.vmem [shape: f32[1,64], index: 4, kind: input, shape index: {}]
  %s5 = inlined_call_operand.vmem [shape: f32[2048,64], index: 5, kind: output, shape index: {}]
  %s6 = sld [smem:[#allocation0]]
  $region53: #{tpu_custom_call.1} parent=0
    _
  %s8 = ssub.s32 1, %s6
  %s9 = scalar_select 0, %s8, %s6
  loop: start=0, step=1, limit=6
  $region2: #{tpu_custom_call.1} parent=0 // loop_pre_header
    _
  $region3: #{tpu_custom_call.1} parent=0 // loop_header
    %s11 = sphi 0, %s15
    %p12 = scmp.ge.s32.totalorder %s11, 6
    %s21 = sphi 0, %s23
    %s24 = sphi 0, %s21
    %s25 = sphi 0, %s24
    %s41 = sphi 0, %s25
    %s45 = sphi 0, %s45
    %s47 = sphi 0, %s45
    %s48 = sphi 0, %s47
    %s62 = sphi 0, %s48
    %s66 = sphi 0, %s66
    %s68 = sphi 0, %s66
    %s69 = sphi 0, %s68
    %s83 = sphi 0, %s69
    %s87 = sphi 0, %s87
    %s89 = sphi 0, %s87
    %s90 = sphi 0, %s89
    %s104 = sphi 0, %s90
    %s108 = sphi 0, %s108
    %s110 = sphi 0, %s108
    %s111 = sphi 0, %s110
    %s125 = sphi 0, %s111
    %s131 = sphi 0, %s133
    %s134 = sphi 0, %s131
    %s135 = sphi 0, %s134
    %s151 = sphi 0, %s135
  $region4: #{tpu_custom_call.1} parent=0 // loop_header_branch
    %14 = sbr.rel (%p12) target = $region8
  $region5: #{tpu_custom_call.1} parent=0 // loop_body
    %s16 = ssub.s32 %s11, 1
    %s17 = ssub.s32 %s11, 2
    %s18 = sadd.s32 %s11, 1
    %s19 = ssub.s32 %s11, %s18
    %p20 = scmp.eq.s32.totalorder %s19, 0
    %s22 = sadd.s32 %s21, 1
    %s23 = scalar_select %p20, %s21, %s22
    %p26 = pneg %p20
    %p27 = scmp.eq.s32.totalorder %s11, 3
    %p28 = por %p26, %p27
    %p29 = scmp.ne.s32.totalorder %s21, %s24
    %p30 = scmp.eq.s32.totalorder %s11, 0
    %p31 = por %p29, %p30
    %p32 = scmp.ne.s32.totalorder %s21, %s24
    %p33 = scmp.eq.s32.totalorder %s16, 3
    %p34 = por %p32, %p33
    %p35 = scmp.ne.s32.totalorder %s24, %s25
    %p36 = scmp.eq.s32.totalorder %s16, 0
    %p37 = por %p35, %p36
    %p38 = scmp.ne.s32.totalorder %s24, %s25
    %p39 = scmp.eq.s32.totalorder %s17, 3
    %p40 = por %p38, %p39
    %p42 = scmp.ne.s32.totalorder %s25, %s41
    %p43 = scmp.eq.s32.totalorder %s17, 0
    %p44 = por %p42, %p43
    %s46 = sadd.s32 %s45, 1
    %p49 = scmp.eq.s32.totalorder %s11, 3
    %p50 = scmp.ne.s32.totalorder %s45, %s47
    %p51 = scmp.eq.s32.totalorder %s11, 0
    %p52 = por %p50, %p51
    %p53 = scmp.ne.s32.totalorder %s45, %s47
    %p54 = scmp.eq.s32.totalorder %s16, 3
    %p55 = por %p53, %p54
    %p56 = scmp.ne.s32.totalorder %s47, %s48
    %p57 = scmp.eq.s32.totalorder %s16, 0
    %p58 = por %p56, %p57
    %p59 = scmp.ne.s32.totalorder %s47, %s48
    %p60 = scmp.eq.s32.totalorder %s17, 3
    %p61 = por %p59, %p60
    %p63 = scmp.ne.s32.totalorder %s48, %s62
    %p64 = scmp.eq.s32.totalorder %s17, 0
    %p65 = por %p63, %p64
    %s67 = sadd.s32 %s66, 1
    %p70 = scmp.eq.s32.totalorder %s11, 3
    %p71 = scmp.ne.s32.totalorder %s66, %s68
    %p72 = scmp.eq.s32.totalorder %s11, 0
    %p73 = por %p71, %p72
    %p74 = scmp.ne.s32.totalorder %s66, %s68
    %p75 = scmp.eq.s32.totalorder %s16, 3
    %p76 = por %p74, %p75
    %p77 = scmp.ne.s32.totalorder %s68, %s69
    %p78 = scmp.eq.s32.totalorder %s16, 0
    %p79 = por %p77, %p78
    %p80 = scmp.ne.s32.totalorder %s68, %s69
    %p81 = scmp.eq.s32.totalorder %s17, 3
    %p82 = por %p80, %p81
    %p84 = scmp.ne.s32.totalorder %s69, %s83
    %p85 = scmp.eq.s32.totalorder %s17, 0
    %p86 = por %p84, %p85
    %s88 = sadd.s32 %s87, 1
    %p91 = scmp.eq.s32.totalorder %s11, 3
    %p92 = scmp.ne.s32.totalorder %s87, %s89
    %p93 = scmp.eq.s32.totalorder %s11, 0
    %p94 = por %p92, %p93
    %p95 = scmp.ne.s32.totalorder %s87, %s89
    %p96 = scmp.eq.s32.totalorder %s16, 3
    %p97 = por %p95, %p96
    %p98 = scmp.ne.s32.totalorder %s89, %s90
    %p99 = scmp.eq.s32.totalorder %s16, 0
    %p100 = por %p98, %p99
    %p101 = scmp.ne.s32.totalorder %s89, %s90
    %p102 = scmp.eq.s32.totalorder %s17, 3
    %p103 = por %p101, %p102
    %p105 = scmp.ne.s32.totalorder %s90, %s104
    %p106 = scmp.eq.s32.totalorder %s17, 0
    %p107 = por %p105, %p106
    %s109 = sadd.s32 %s108, 1
    %p112 = scmp.eq.s32.totalorder %s11, 3
    %p113 = scmp.ne.s32.totalorder %s108, %s110
    %p114 = scmp.eq.s32.totalorder %s11, 0
    %p115 = por %p113, %p114
    %p116 = scmp.ne.s32.totalorder %s108, %s110
    %p117 = scmp.eq.s32.totalorder %s16, 3
    %p118 = por %p116, %p117
    %p119 = scmp.ne.s32.totalorder %s110, %s111
    %p120 = scmp.eq.s32.totalorder %s16, 0
    %p121 = por %p119, %p120
    %p122 = scmp.ne.s32.totalorder %s110, %s111
    %p123 = scmp.eq.s32.totalorder %s17, 3
    %p124 = por %p122, %p123
    %p126 = scmp.ne.s32.totalorder %s111, %s125
    %p127 = scmp.eq.s32.totalorder %s17, 0
    %p128 = por %p126, %p127
    %s129 = ssub.s32 %s11, %s18
    %p130 = scmp.eq.s32.totalorder %s129, 0
    %s132 = sadd.s32 %s131, 1
    %s133 = scalar_select %p130, %s131, %s132
    %p136 = pneg %p130
    %p137 = scmp.eq.s32.totalorder %s11, 3
    %p138 = por %p136, %p137
    %p139 = scmp.ne.s32.totalorder %s131, %s134
    %p140 = scmp.eq.s32.totalorder %s11, 0
    %p141 = por %p139, %p140
    %p142 = scmp.ne.s32.totalorder %s131, %s134
    %p143 = scmp.eq.s32.totalorder %s16, 3
    %p144 = por %p142, %p143
    %p145 = scmp.ne.s32.totalorder %s134, %s135
    %p146 = scmp.eq.s32.totalorder %s16, 0
    %p147 = por %p145, %p146
    %p148 = scmp.ne.s32.totalorder %s134, %s135
    %p149 = scmp.eq.s32.totalorder %s17, 3
    %p150 = por %p148, %p149
    %p152 = scmp.ne.s32.totalorder %s135, %s151
    %p153 = scmp.eq.s32.totalorder %s17, 0
    %p154 = por %p152, %p153
    %p155 = scmp.le.s32.totalorder 1, %s11
    %p156 = scmp.lt.s32.totalorder %s11, 5
    %p157 = pnand %p155, %p156
    %p158 = pneg %p157
    // Predicated region
    $region9: #{tpu_custom_call.1} parent=5 // pred_check
      _
    $region10: #{tpu_custom_call.1} parent=5 // pred_check_branch
      %160 = sbr.rel (%p157) target = $region12
    $region11: #{tpu_custom_call.1} parent=5 // pred_region
      %s161 = ssub.s32 %s11, 1
      // Predicated region
      $region13: #{tpu_custom_call.1} parent=11 // pred_check
        %p162 = pneg %p58
      $region14: #{tpu_custom_call.1} parent=11 // pred_check_branch
        %164 = sbr.rel (%p162) target = $region16
      $region15: #{tpu_custom_call.1} parent=11 // pred_region
        _
      $region16: #{tpu_custom_call.1} parent=11 // pred_fallthru
        _
      // Predicated region
      $region17: #{tpu_custom_call.1} parent=11 // pred_check
        %p165 = pneg %p79
      $region18: #{tpu_custom_call.1} parent=11 // pred_check_branch
        %167 = sbr.rel (%p165) target = $region20
      $region19: #{tpu_custom_call.1} parent=11 // pred_region
        _
      $region20: #{tpu_custom_call.1} parent=11 // pred_fallthru
        _
      // Predicated region
      $region21: #{tpu_custom_call.1} parent=11 // pred_check
        %p168 = pneg %p100
      $region22: #{tpu_custom_call.1} parent=11 // pred_check_branch
        %170 = sbr.rel (%p168) target = $region24
      $region23: #{tpu_custom_call.1} parent=11 // pred_region
        _
      $region24: #{tpu_custom_call.1} parent=11 // pred_fallthru
        _
      // Predicated region
      $region25: #{tpu_custom_call.1} parent=11 // pred_check
        %p171 = pneg %p121
      $region26: #{tpu_custom_call.1} parent=11 // pred_check_branch
        %173 = sbr.rel (%p171) target = $region28
      $region27: #{tpu_custom_call.1} parent=11 // pred_region
        _
      $region28: #{tpu_custom_call.1} parent=11 // pred_fallthru
        _
    $region12: #{tpu_custom_call.1} parent=5 // pred_fallthru
      _
    %p174 = scmp.lt.s32.totalorder %s11, 4
    // Predicated region
    $region29: #{tpu_custom_call.1} parent=5 // pred_check
      %p175 = pneg %p174
    $region30: #{tpu_custom_call.1} parent=5 // pred_check_branch
      %177 = sbr.rel (%p175) target = $region32
    $region31: #{tpu_custom_call.1} parent=5 // pred_region
      // Predicated region
      $region33: #{tpu_custom_call.1} parent=31 // pred_check
        %p178 = pneg %p31
      $region34: #{tpu_custom_call.1} parent=31 // pred_check_branch
        %180 = sbr.rel (%p178) target = $region36
      $region35: #{tpu_custom_call.1} parent=31 // pred_region
        %s181 = smul.u32 64, %s11
        %p182 = scmp.lt.s32.totalorder %s181, 255
        %s183 = scalar_select %p182, %s181, 255
        %s184 = smul.addr %s183, 8
        %s185 = scalar_lea.vmem %s0, %s184
        %s186 = smul.u32 64, %s11
      $region36: #{tpu_custom_call.1} parent=31 // pred_fallthru
        _
    $region32: #{tpu_custom_call.1} parent=5 // pred_fallthru
      _
    %p187 = scmp.le.s32.totalorder 1, %s11
    %p188 = scmp.lt.s32.totalorder %s11, 5
    %p189 = pnand %p187, %p188
    %p190 = pneg %p189
    // Predicated region
    $region37: #{tpu_custom_call.1} parent=5 // pred_check
      _
    $region38: #{tpu_custom_call.1} parent=5 // pred_check_branch
      %192 = sbr.rel (%p189) target = $region40
    $region39: #{tpu_custom_call.1} parent=5 // pred_region
      %s193 = ssub.s32 %s11, 1
      %s194 = smul.u32 64, %s16
      %p195 = scmp.lt.s32.totalorder %s194, 255
      %s196 = scalar_select %p195, %s194, 255
      %s197 = smul.addr %s196, 8
      %s198 = scalar_lea.vmem %s0, %s197
      %p199 = pneg %p37
      %p200 = pneg %p34
      %p201 = pneg %p58
      %p202 = pneg %p55
      %p203 = pneg %p79
      %p204 = pneg %p76
      %p205 = pneg %p100
      %p206 = pneg %p97
      %p207 = pneg %p121
      %p208 = pneg %p118
      %p209 = pneg %p147
      %p210 = pneg %p144
      %s211 = smul.u32 64, %s16
      %p212 = scmp.lt.s32.totalorder %s211, 255
      %s213 = scalar_select %p212, %s211, 255
      %s214 = smul.addr %s213, 8
      %s215 = scalar_lea.vmem %s5, %s214
      %s216 = smul.u32 64, %s16
      %p217 = scmp.lt.s32.totalorder %s216, 255
      %s218 = scalar_select %p217, %s216, 255
      %s219 = smul.addr %s218, 8
      %s220 = scalar_lea.vmem %s0, %s219
      %s221 = smul.u32 64, %s16
      %s222 = smul.u32 64, %s16
      %p223 = scmp.lt.s32.totalorder %s222, 255
      %s224 = scalar_select %p223, %s222, 255
      %s225 = smul.addr %s224, 8
      %s226 = scalar_lea.vmem %s5, %s225
      %s227 = smul.u32 64, %s16
      %v229 = vld [vmem:[%s220] sm:$0xff]
      %v230 = vld [vmem:[%s220 + $0x8] sm:$0xff]
      %v231 = vld [vmem:[%s220 + $0x10] sm:$0xff]
      %v232 = vld [vmem:[%s220 + $0x18] sm:$0xff]
      %v233 = vld [vmem:[%s220 + $0x20] sm:$0xff]
      %v234 = vld [vmem:[%s220 + $0x28] sm:$0xff]
      %v235 = vld [vmem:[%s220 + $0x30] sm:$0xff]
      %v236 = vld [vmem:[%s220 + $0x38] sm:$0xff]
      %v237 = vld [vmem:[%s220 + $0x40] sm:$0xff]
      %v238 = vld [vmem:[%s220 + $0x48] sm:$0xff]
      %v239 = vld [vmem:[%s220 + $0x50] sm:$0xff]
      %v240 = vld [vmem:[%s220 + $0x58] sm:$0xff]
      %v241 = vld [vmem:[%s220 + $0x60] sm:$0xff]
      %v242 = vld [vmem:[%s220 + $0x68] sm:$0xff]
      %v243 = vld [vmem:[%s220 + $0x70] sm:$0xff]
      %v244 = vld [vmem:[%s220 + $0x78] sm:$0xff]
      %v245 = vld [vmem:[%s220 + $0x80] sm:$0xff]
      %v246 = vld [vmem:[%s220 + $0x88] sm:$0xff]
      %v247 = vld [vmem:[%s220 + $0x90] sm:$0xff]
      %v248 = vld [vmem:[%s220 + $0x98] sm:$0xff]
      %v249 = vld [vmem:[%s220 + $0xa0] sm:$0xff]
      %v250 = vld [vmem:[%s220 + $0xa8] sm:$0xff]
      %v251 = vld [vmem:[%s220 + $0xb0] sm:$0xff]
      %v252 = vld [vmem:[%s220 + $0xb8] sm:$0xff]
      %v253 = vld [vmem:[%s220 + $0xc0] sm:$0xff]
      %v254 = vld [vmem:[%s220 + $0xc8] sm:$0xff]
      %v255 = vld [vmem:[%s220 + $0xd0] sm:$0xff]
      %v256 = vld [vmem:[%s220 + $0xd8] sm:$0xff]
      %v257 = vld [vmem:[%s220 + $0xe0] sm:$0xff]
      %v258 = vld [vmem:[%s220 + $0xe8] sm:$0xff]
      %v259 = vld [vmem:[%s220 + $0xf0] sm:$0xff]
      %v260 = vld [vmem:[%s220 + $0xf8] sm:$0xff]
      %v261 = vld [vmem:[%s220 + $0x100] sm:$0xff]
      %v262 = vld [vmem:[%s220 + $0x108] sm:$0xff]
      %v263 = vld [vmem:[%s220 + $0x110] sm:$0xff]
      %v264 = vld [vmem:[%s220 + $0x118] sm:$0xff]
      %v265 = vld [vmem:[%s220 + $0x120] sm:$0xff]
      %v266 = vld [vmem:[%s220 + $0x128] sm:$0xff]
      %v267 = vld [vmem:[%s220 + $0x130] sm:$0xff]
      %v268 = vld [vmem:[%s220 + $0x138] sm:$0xff]
      %v269 = vld [vmem:[%s220 + $0x140] sm:$0xff]
      %v270 = vld [vmem:[%s220 + $0x148] sm:$0xff]
      %v271 = vld [vmem:[%s220 + $0x150] sm:$0xff]
      %v272 = vld [vmem:[%s220 + $0x158] sm:$0xff]
      %v273 = vld [vmem:[%s220 + $0x160] sm:$0xff]
      %v274 = vld [vmem:[%s220 + $0x168] sm:$0xff]
      %v275 = vld [vmem:[%s220 + $0x170] sm:$0xff]
      %v276 = vld [vmem:[%s220 + $0x178] sm:$0xff]
      %v277 = vld [vmem:[%s220 + $0x180] sm:$0xff]
      %v278 = vld [vmem:[%s220 + $0x188] sm:$0xff]
      %v279 = vld [vmem:[%s220 + $0x190] sm:$0xff]
      %v280 = vld [vmem:[%s220 + $0x198] sm:$0xff]
      %v281 = vld [vmem:[%s220 + $0x1a0] sm:$0xff]
      %v282 = vld [vmem:[%s220 + $0x1a8] sm:$0xff]
      %v283 = vld [vmem:[%s220 + $0x1b0] sm:$0xff]
      %v284 = vld [vmem:[%s220 + $0x1b8] sm:$0xff]
      %v285 = vld [vmem:[%s220 + $0x1c0] sm:$0xff]
      %v286 = vld [vmem:[%s220 + $0x1c8] sm:$0xff]
      %v287 = vld [vmem:[%s220 + $0x1d0] sm:$0xff]
      %v288 = vld [vmem:[%s220 + $0x1d8] sm:$0xff]
      %v289 = vld [vmem:[%s220 + $0x1e0] sm:$0xff]
      %v290 = vld [vmem:[%s220 + $0x1e8] sm:$0xff]
      %v291 = vld [vmem:[%s220 + $0x1f0] sm:$0xff]
      %v292 = vld [vmem:[%s220 + $0x1f8] sm:$0xff]
      %v293 = vpack.c.bf16 %v230, %v229
      %v294 = vpack.c.bf16 %v232, %v231
      %v295 = vpack.c.bf16 %v234, %v233
      %v296 = vpack.c.bf16 %v236, %v235
      %v297 = vpack.c.bf16 %v238, %v237
      %v298 = vpack.c.bf16 %v240, %v239
      %v299 = vpack.c.bf16 %v242, %v241
      %v300 = vpack.c.bf16 %v244, %v243
      %v301 = vpack.c.bf16 %v246, %v245
      %v302 = vpack.c.bf16 %v248, %v247
      %v303 = vpack.c.bf16 %v250, %v249
      %v304 = vpack.c.bf16 %v252, %v251
      %v305 = vpack.c.bf16 %v254, %v253
      %v306 = vpack.c.bf16 %v256, %v255
      %v307 = vpack.c.bf16 %v258, %v257
      %v308 = vpack.c.bf16 %v260, %v259
      %v309 = vpack.c.bf16 %v262, %v261
      %v310 = vpack.c.bf16 %v264, %v263
      %v311 = vpack.c.bf16 %v266, %v265
      %v312 = vpack.c.bf16 %v268, %v267
      %v313 = vpack.c.bf16 %v270, %v269
      %v314 = vpack.c.bf16 %v272, %v271
      %v315 = vpack.c.bf16 %v274, %v273
      %v316 = vpack.c.bf16 %v276, %v275
      %v317 = vpack.c.bf16 %v278, %v277
      %v318 = vpack.c.bf16 %v280, %v279
      %v319 = vpack.c.bf16 %v282, %v281
      %v320 = vpack.c.bf16 %v284, %v283
      %v321 = vpack.c.bf16 %v286, %v285
      %v322 = vpack.c.bf16 %v288, %v287
      %v323 = vpack.c.bf16 %v290, %v289
      %v324 = vpack.c.bf16 %v292, %v291
      %v325 = vld [vmem:[%s3] sm:$0xf]
      %v326 = vld [vmem:[%s3 + $0x4] sm:$0xf]
      %v327 = vld [vmem:[%s3 + $0x8] sm:$0xf]
      %v328 = vld [vmem:[%s3 + $0xc] sm:$0xf]
      %v329 = vld [vmem:[%s3 + $0x10] sm:$0xf]
      %v330 = vld [vmem:[%s3 + $0x14] sm:$0xf]
      %v331 = vld [vmem:[%s3 + $0x18] sm:$0x1]
      %v332 = vld [vmem:[%s4] sm:$0x1]
      %v334 = vlaneseq
      %v335 = vshrl.u32 %v334, 7
      %v336 = vsub.s32 0, %v335
      %v337 = vrot.slane %v332, %v336
      %v346 = vunpack.c.l.b16 %v325
      %v347 = vunpack.c.l.b16 %v326
      %v348 = vunpack.c.l.b16 %v327
      %v349 = vunpack.c.l.b16 %v328
      %v350 = vunpack.c.l.b16 %v329
      %v351 = vunpack.c.l.b16 %v330
      %v352 = vunpack.c.l.b16 %v331
      %v353 = vpack.c.b16 %v347, %v346
      %v354 = vpack.c.b16 %v349, %v348
      %v355 = vpack.c.b16 %v351, %v350
      %v356 = vpack.c.b16 %v352, %v352
      %vm360 = vcmask 400384
      %v362 = vsel %vm360, %v293, 0
      %v365 = vsel %vm360, %v294, 0
      %v368 = vsel %vm360, %v295, 0
      %v371 = vsel %vm360, %v296, 0
      %v374 = vsel %vm360, %v297, 0
      %v377 = vsel %vm360, %v298, 0
      %v380 = vsel %vm360, %v299, 0
      %v383 = vsel %vm360, %v300, 0
      %v386 = vsel %vm360, %v301, 0
      %v389 = vsel %vm360, %v302, 0
      %v392 = vsel %vm360, %v303, 0
      %v395 = vsel %vm360, %v304, 0
      %v398 = vsel %vm360, %v305, 0
      %v401 = vsel %vm360, %v306, 0
      %v404 = vsel %vm360, %v307, 0
      %v407 = vsel %vm360, %v308, 0
      %v410 = vsel %vm360, %v309, 0
      %v413 = vsel %vm360, %v310, 0
      %v416 = vsel %vm360, %v311, 0
      %v419 = vsel %vm360, %v312, 0
      %v422 = vsel %vm360, %v313, 0
      %v425 = vsel %vm360, %v314, 0
      %v428 = vsel %vm360, %v315, 0
      %v431 = vsel %vm360, %v316, 0
      %v434 = vsel %vm360, %v317, 0
      %v437 = vsel %vm360, %v318, 0
      %v440 = vsel %vm360, %v319, 0
      %v443 = vsel %vm360, %v320, 0
      %v446 = vsel %vm360, %v321, 0
      %v449 = vsel %vm360, %v322, 0
      %v452 = vsel %vm360, %v323, 0
      %v455 = vsel %vm360, %v324, 0
      %vm457 = vcmask 1040384
      %v458 = vsel 0, 4294967295, 65535
      %v459 = vsel %vm457, %v458, 0
      %v461 = vand.u32 %v356, %v459
      %463 = vmatprep.subr.bf16.mxu0 0
      %464 = vmatpush1.bf16.msra.mxu0 %v353
      %465 = vmatprep.subr.bf16.mxu0 0
      %466 = vmatpush1.bf16.msra.mxu0 %v354
      %467 = vmatprep.subr.bf16.mxu0 0
      %468 = vmatpush1.bf16.msra.mxu0 %v355
      %469 = vmatprep.subr.bf16.mxu0 0
      %470 = vmatpush1.bf16.msra.mxu0 %v461
      %471 = vmatprep.subr.bf16.mxu0 0
      %472 = vmatpush1.bf16.msra.mxu0 0
      %473 = vmatprep.subr.bf16.mxu0 0
      %474 = vmatpush1.bf16.msra.mxu0 0
      %475 = vmatprep.subr.bf16.mxu0 0
      %476 = vmatpush1.bf16.msra.mxu0 0
      %477 = vmatprep.subr.bf16.mxu0 0
      %478 = vmatpush1.bf16.msra.mxu0 0
      %479 = vmatprep.subr.bf16.mxu0 0
      %480 = vmatpush1.bf16.msra.mxu0 0
      %481 = vmatprep.subr.bf16.mxu0 0
      %482 = vmatpush1.bf16.msra.mxu0 0
      %483 = vmatprep.subr.bf16.mxu0 0
      %484 = vmatpush1.bf16.msra.mxu0 0
      %485 = vmatprep.subr.bf16.mxu0 0
      %486 = vmatpush1.bf16.msra.mxu0 0
      %487 = vmatprep.subr.bf16.mxu0 0
      %488 = vmatpush1.bf16.msra.mxu0 0
      %489 = vmatprep.subr.bf16.mxu0 0
      %490 = vmatpush1.bf16.msra.mxu0 0
      %491 = vmatprep.subr.bf16.mxu0 0
      %492 = vmatpush1.bf16.msra.mxu0 0
      %493 = vmatprep.subr.bf16.mxu0 0
      %494 = vmatpush1.bf16.msra.mxu0 0
      %495 = vmatprep.mubr.bf16.mxu0 0
      %496 = vmatmul.mubr.bf16.gmra.mrb[0].mxu0 %v362
      %v497 = vpop.f32.mrb[0].mxu0
      %v498 = vadd.f32 %v337, %v497
      %v499 = vpop.f32.mrb[0].mxu0
      %v500 = vpop.f32.mrb[0].mxu0
      %v501 = vadd.f32 %v337, %v500
      %v502 = vpop.f32.mrb[0].mxu0
      %503 = vmatprep.mubr.bf16.mxu0 0
      %504 = vmatmul.mubr.bf16.gmra.mrb[0].mxu0 %v365
      %v505 = vpop.f32.mrb[0].mxu0
      %v506 = vadd.f32 %v337, %v505
      %v507 = vpop.f32.mrb[0].mxu0
      %v508 = vpop.f32.mrb[0].mxu0
      %v509 = vadd.f32 %v337, %v508
      %v510 = vpop.f32.mrb[0].mxu0
      %511 = vmatprep.mubr.bf16.mxu0 0
      %512 = vmatmul.mubr.bf16.gmra.mrb[0].mxu0 %v368
      %v513 = vpop.f32.mrb[0].mxu0
      %v514 = vadd.f32 %v337, %v513
      %v515 = vpop.f32.mrb[0].mxu0
      %v516 = vpop.f32.mrb[0].mxu0
      %v517 = vadd.f32 %v337, %v516
      %v518 = vpop.f32.mrb[0].mxu0
      %519 = vmatprep.mubr.bf16.mxu0 0
      %520 = vmatmul.mubr.bf16.gmra.mrb[0].mxu0 %v371
      %v521 = vpop.f32.mrb[0].mxu0
      %v522 = vadd.f32 %v337, %v521
      %v523 = vpop.f32.mrb[0].mxu0
      %v524 = vpop.f32.mrb[0].mxu0
      %v525 = vadd.f32 %v337, %v524
      %v526 = vpop.f32.mrb[0].mxu0
      %527 = vmatprep.mubr.bf16.mxu0 0
      %528 = vmatmul.mubr.bf16.gmra.mrb[0].mxu0 %v374
      %v529 = vpop.f32.mrb[0].mxu0
      %v530 = vadd.f32 %v337, %v529
      %v531 = vpop.f32.mrb[0].mxu0
      %v532 = vpop.f32.mrb[0].mxu0
      %v533 = vadd.f32 %v337, %v532
      %v534 = vpop.f32.mrb[0].mxu0
      %535 = vmatprep.mubr.bf16.mxu0 0
      %536 = vmatmul.mubr.bf16.gmra.mrb[0].mxu0 %v377
      %v537 = vpop.f32.mrb[0].mxu0
      %v538 = vadd.f32 %v337, %v537
      %v539 = vpop.f32.mrb[0].mxu0
      %v540 = vpop.f32.mrb[0].mxu0
      %v541 = vadd.f32 %v337, %v540
      %v542 = vpop.f32.mrb[0].mxu0
      %543 = vmatprep.mubr.bf16.mxu0 0
      %544 = vmatmul.mubr.bf16.gmra.mrb[0].mxu0 %v380
      %v545 = vpop.f32.mrb[0].mxu0
      %v546 = vadd.f32 %v337, %v545
      %v547 = vpop.f32.mrb[0].mxu0
      %v548 = vpop.f32.mrb[0].mxu0
      %v549 = vadd.f32 %v337, %v548
      %v550 = vpop.f32.mrb[0].mxu0
      %551 = vmatprep.mubr.bf16.mxu0 0
      %552 = vmatmul.mubr.bf16.gmra.mrb[0].mxu0 %v383
      %v553 = vpop.f32.mrb[0].mxu0
      %v554 = vadd.f32 %v337, %v553
      %v555 = vpop.f32.mrb[0].mxu0
      %v556 = vpop.f32.mrb[0].mxu0
      %v557 = vadd.f32 %v337, %v556
      %v558 = vpop.f32.mrb[0].mxu0
      %559 = vmatprep.mubr.bf16.mxu0 0
      %560 = vmatmul.mubr.bf16.gmra.mrb[0].mxu0 %v386
      %v561 = vpop.f32.mrb[0].mxu0
      %v562 = vadd.f32 %v337, %v561
      %v563 = vpop.f32.mrb[0].mxu0
      %v564 = vpop.f32.mrb[0].mxu0
      %v565 = vadd.f32 %v337, %v564
      %v566 = vpop.f32.mrb[0].mxu0
      %567 = vmatprep.mubr.bf16.mxu0 0
      %568 = vmatmul.mubr.bf16.gmra.mrb[0].mxu0 %v389
      %v569 = vpop.f32.mrb[0].mxu0
      %v570 = vadd.f32 %v337, %v569
      %v571 = vpop.f32.mrb[0].mxu0
      %v572 = vpop.f32.mrb[0].mxu0
      %v573 = vadd.f32 %v337, %v572
      %v574 = vpop.f32.mrb[0].mxu0
      %575 = vmatprep.mubr.bf16.mxu0 0
      %576 = vmatmul.mubr.bf16.gmra.mrb[0].mxu0 %v392
      %v577 = vpop.f32.mrb[0].mxu0
      %v578 = vadd.f32 %v337, %v577
      %v579 = vpop.f32.mrb[0].mxu0
      %v580 = vpop.f32.mrb[0].mxu0
      %v581 = vadd.f32 %v337, %v580
      %v582 = vpop.f32.mrb[0].mxu0
      %583 = vmatprep.mubr.bf16.mxu0 0
      %584 = vmatmul.mubr.bf16.gmra.mrb[0].mxu0 %v395
      %v585 = vpop.f32.mrb[0].mxu0
      %v586 = vadd.f32 %v337, %v585
      %v587 = vpop.f32.mrb[0].mxu0
      %v588 = vpop.f32.mrb[0].mxu0
      %v589 = vadd.f32 %v337, %v588
      %v590 = vpop.f32.mrb[0].mxu0
      %591 = vmatprep.mubr.bf16.mxu0 0
      %592 = vmatmul.mubr.bf16.gmra.mrb[0].mxu0 %v398
      %v593 = vpop.f32.mrb[0].mxu0
      %v594 = vadd.f32 %v337, %v593
      %v595 = vpop.f32.mrb[0].mxu0
      %v596 = vpop.f32.mrb[0].mxu0
      %v597 = vadd.f32 %v337, %v596
      %v598 = vpop.f32.mrb[0].mxu0
      %599 = vmatprep.mubr.bf16.mxu0 0
      %600 = vmatmul.mubr.bf16.gmra.mrb[0].mxu0 %v401
      %v601 = vpop.f32.mrb[0].mxu0
      %v602 = vadd.f32 %v337, %v601
      %v603 = vpop.f32.mrb[0].mxu0
      %v604 = vpop.f32.mrb[0].mxu0
      %v605 = vadd.f32 %v337, %v604
      %v606 = vpop.f32.mrb[0].mxu0
      %607 = vmatprep.mubr.bf16.mxu0 0
      %608 = vmatmul.mubr.bf16.gmra.mrb[0].mxu0 %v404
      %v609 = vpop.f32.mrb[0].mxu0
      %v610 = vadd.f32 %v337, %v609
      %v611 = vpop.f32.mrb[0].mxu0
      %v612 = vpop.f32.mrb[0].mxu0
      %v613 = vadd.f32 %v337, %v612
      %v614 = vpop.f32.mrb[0].mxu0
      %615 = vmatprep.mubr.bf16.mxu0 0
      %616 = vmatmul.mubr.bf16.gmra.mrb[0].mxu0 %v407
      %v617 = vpop.f32.mrb[0].mxu0
      %v618 = vadd.f32 %v337, %v617
      %v619 = vpop.f32.mrb[0].mxu0
      %v620 = vpop.f32.mrb[0].mxu0
      %v621 = vadd.f32 %v337, %v620
      %v622 = vpop.f32.mrb[0].mxu0
      %623 = vmatprep.mubr.bf16.mxu0 0
      %624 = vmatmul.mubr.bf16.gmra.mrb[0].mxu0 %v410
      %v625 = vpop.f32.mrb[0].mxu0
      %v626 = vadd.f32 %v337, %v625
      %v627 = vpop.f32.mrb[0].mxu0
      %v628 = vpop.f32.mrb[0].mxu0
      %v629 = vadd.f32 %v337, %v628
      %v630 = vpop.f32.mrb[0].mxu0
      %631 = vmatprep.mubr.bf16.mxu0 0
      %632 = vmatmul.mubr.bf16.gmra.mrb[0].mxu0 %v413
      %v633 = vpop.f32.mrb[0].mxu0
      %v634 = vadd.f32 %v337, %v633
      %v635 = vpop.f32.mrb[0].mxu0
      %v636 = vpop.f32.mrb[0].mxu0
      %v637 = vadd.f32 %v337, %v636
      %v638 = vpop.f32.mrb[0].mxu0
      %639 = vmatprep.mubr.bf16.mxu0 0
      %640 = vmatmul.mubr.bf16.gmra.mrb[0].mxu0 %v416
      %v641 = vpop.f32.mrb[0].mxu0
      %v642 = vadd.f32 %v337, %v641
      %v643 = vpop.f32.mrb[0].mxu0
      %v644 = vpop.f32.mrb[0].mxu0
      %v645 = vadd.f32 %v337, %v644
      %v646 = vpop.f32.mrb[0].mxu0
      %647 = vmatprep.mubr.bf16.mxu0 0
      %648 = vmatmul.mubr.bf16.gmra.mrb[0].mxu0 %v419
      %v649 = vpop.f32.mrb[0].mxu0
      %v650 = vadd.f32 %v337, %v649
      %v651 = vpop.f32.mrb[0].mxu0
      %v652 = vpop.f32.mrb[0].mxu0
      %v653 = vadd.f32 %v337, %v652
      %v654 = vpop.f32.mrb[0].mxu0
      %655 = vmatprep.mubr.bf16.mxu0 0
      %656 = vmatmul.mubr.bf16.gmra.mrb[0].mxu0 %v422
      %v657 = vpop.f32.mrb[0].mxu0
      %v658 = vadd.f32 %v337, %v657
      %v659 = vpop.f32.mrb[0].mxu0
      %v660 = vpop.f32.mrb[0].mxu0
      %v661 = vadd.f32 %v337, %v660
      %v662 = vpop.f32.mrb[0].mxu0
      %663 = vmatprep.mubr.bf16.mxu0 0
      %664 = vmatmul.mubr.bf16.gmra.mrb[0].mxu0 %v425
      %v665 = vpop.f32.mrb[0].mxu0
      %v666 = vadd.f32 %v337, %v665
      %v667 = vpop.f32.mrb[0].mxu0
      %v668 = vpop.f32.mrb[0].mxu0
      %v669 = vadd.f32 %v337, %v668
      %v670 = vpop.f32.mrb[0].mxu0
      %671 = vmatprep.mubr.bf16.mxu0 0
      %672 = vmatmul.mubr.bf16.gmra.mrb[0].mxu0 %v428
      %v673 = vpop.f32.mrb[0].mxu0
      %v674 = vadd.f32 %v337, %v673
      %v675 = vpop.f32.mrb[0].mxu0
      %v676 = vpop.f32.mrb[0].mxu0
      %v677 = vadd.f32 %v337, %v676
      %v678 = vpop.f32.mrb[0].mxu0
      %679 = vmatprep.mubr.bf16.mxu0 0
      %680 = vmatmul.mubr.bf16.gmra.mrb[0].mxu0 %v431
      %v681 = vpop.f32.mrb[0].mxu0
      %v682 = vadd.f32 %v337, %v681
      %v683 = vpop.f32.mrb[0].mxu0
      %v684 = vpop.f32.mrb[0].mxu0
      %v685 = vadd.f32 %v337, %v684
      %v686 = vpop.f32.mrb[0].mxu0
      %687 = vmatprep.mubr.bf16.mxu0 0
      %688 = vmatmul.mubr.bf16.gmra.mrb[0].mxu0 %v434
      %v689 = vpop.f32.mrb[0].mxu0
      %v690 = vadd.f32 %v337, %v689
      %v691 = vpop.f32.mrb[0].mxu0
      %v692 = vpop.f32.mrb[0].mxu0
      %v693 = vadd.f32 %v337, %v692
      %v694 = vpop.f32.mrb[0].mxu0
      %695 = vmatprep.mubr.bf16.mxu0 0
      %696 = vmatmul.mubr.bf16.gmra.mrb[0].mxu0 %v437
      %v697 = vpop.f32.mrb[0].mxu0
      %v698 = vadd.f32 %v337, %v697
      %v699 = vpop.f32.mrb[0].mxu0
      %v700 = vpop.f32.mrb[0].mxu0
      %v701 = vadd.f32 %v337, %v700
      %v702 = vpop.f32.mrb[0].mxu0
      %703 = vmatprep.mubr.bf16.mxu0 0
      %704 = vmatmul.mubr.bf16.gmra.mrb[0].mxu0 %v440
      %v705 = vpop.f32.mrb[0].mxu0
      %v706 = vadd.f32 %v337, %v705
      %v707 = vpop.f32.mrb[0].mxu0
      %v708 = vpop.f32.mrb[0].mxu0
      %v709 = vadd.f32 %v337, %v708
      %v710 = vpop.f32.mrb[0].mxu0
      %711 = vmatprep.mubr.bf16.mxu0 0
      %712 = vmatmul.mubr.bf16.gmra.mrb[0].mxu0 %v443
      %v713 = vpop.f32.mrb[0].mxu0
      %v714 = vadd.f32 %v337, %v713
      %v715 = vpop.f32.mrb[0].mxu0
      %v716 = vpop.f32.mrb[0].mxu0
      %v717 = vadd.f32 %v337, %v716
      %v718 = vpop.f32.mrb[0].mxu0
      %719 = vmatprep.mubr.bf16.mxu0 0
      %720 = vmatmul.mubr.bf16.gmra.mrb[0].mxu0 %v446
      %v721 = vpop.f32.mrb[0].mxu0
      %v722 = vadd.f32 %v337, %v721
      %v723 = vpop.f32.mrb[0].mxu0
      %v724 = vpop.f32.mrb[0].mxu0
      %v725 = vadd.f32 %v337, %v724
      %v726 = vpop.f32.mrb[0].mxu0
      %727 = vmatprep.mubr.bf16.mxu0 0
      %728 = vmatmul.mubr.bf16.gmra.mrb[0].mxu0 %v449
      %v729 = vpop.f32.mrb[0].mxu0
      %v730 = vadd.f32 %v337, %v729
      %v731 = vpop.f32.mrb[0].mxu0
      %v732 = vpop.f32.mrb[0].mxu0
      %v733 = vadd.f32 %v337, %v732
      %v734 = vpop.f32.mrb[0].mxu0
      %735 = vmatprep.mubr.bf16.mxu0 0
      %736 = vmatmul.mubr.bf16.gmra.mrb[0].mxu0 %v452
      %v737 = vpop.f32.mrb[0].mxu0
      %v738 = vadd.f32 %v337, %v737
      %v739 = vpop.f32.mrb[0].mxu0
      %v740 = vpop.f32.mrb[0].mxu0
      %v741 = vadd.f32 %v337, %v740
      %v742 = vpop.f32.mrb[0].mxu0
      %743 = vmatprep.mubr.bf16.mxu0 0
      %744 = vmatmul.mubr.bf16.gmra.mrb[0].mxu0 %v455
      %v745 = vpop.f32.mrb[0].mxu0
      %v746 = vadd.f32 %v337, %v745
      %v747 = vpop.f32.mrb[0].mxu0
      %v748 = vpop.f32.mrb[0].mxu0
      %v749 = vadd.f32 %v337, %v748
      %v750 = vpop.f32.mrb[0].mxu0
      %751 = vdwg.mxu0
      %vm752 = vcmask 523264
      %753 = vst.msk [vmem:[%s226] sm:$0xff] %vm752, %v498
      %754 = vst.msk [vmem:[%s226 + $0x8] sm:$0xff] %vm752, %v501
      %755 = vst.msk [vmem:[%s226 + $0x10] sm:$0xff] %vm752, %v506
      %756 = vst.msk [vmem:[%s226 + $0x18] sm:$0xff] %vm752, %v509
      %757 = vst.msk [vmem:[%s226 + $0x20] sm:$0xff] %vm752, %v514
      %758 = vst.msk [vmem:[%s226 + $0x28] sm:$0xff] %vm752, %v517
      %759 = vst.msk [vmem:[%s226 + $0x30] sm:$0xff] %vm752, %v522
      %760 = vst.msk [vmem:[%s226 + $0x38] sm:$0xff] %vm752, %v525
      %761 = vst.msk [vmem:[%s226 + $0x40] sm:$0xff] %vm752, %v530
      %762 = vst.msk [vmem:[%s226 + $0x48] sm:$0xff] %vm752, %v533
      %763 = vst.msk [vmem:[%s226 + $0x50] sm:$0xff] %vm752, %v538
      %764 = vst.msk [vmem:[%s226 + $0x58] sm:$0xff] %vm752, %v541
      %765 = vst.msk [vmem:[%s226 + $0x60] sm:$0xff] %vm752, %v546
      %766 = vst.msk [vmem:[%s226 + $0x68] sm:$0xff] %vm752, %v549
      %767 = vst.msk [vmem:[%s226 + $0x70] sm:$0xff] %vm752, %v554
      %768 = vst.msk [vmem:[%s226 + $0x78] sm:$0xff] %vm752, %v557
      %769 = vst.msk [vmem:[%s226 + $0x80] sm:$0xff] %vm752, %v562
      %770 = vst.msk [vmem:[%s226 + $0x88] sm:$0xff] %vm752, %v565
      %771 = vst.msk [vmem:[%s226 + $0x90] sm:$0xff] %vm752, %v570
      %772 = vst.msk [vmem:[%s226 + $0x98] sm:$0xff] %vm752, %v573
      %773 = vst.msk [vmem:[%s226 + $0xa0] sm:$0xff] %vm752, %v578
      %774 = vst.msk [vmem:[%s226 + $0xa8] sm:$0xff] %vm752, %v581
      %775 = vst.msk [vmem:[%s226 + $0xb0] sm:$0xff] %vm752, %v586
      %776 = vst.msk [vmem:[%s226 + $0xb8] sm:$0xff] %vm752, %v589
      %777 = vst.msk [vmem:[%s226 + $0xc0] sm:$0xff] %vm752, %v594
      %778 = vst.msk [vmem:[%s226 + $0xc8] sm:$0xff] %vm752, %v597
      %779 = vst.msk [vmem:[%s226 + $0xd0] sm:$0xff] %vm752, %v602
      %780 = vst.msk [vmem:[%s226 + $0xd8] sm:$0xff] %vm752, %v605
      %781 = vst.msk [vmem:[%s226 + $0xe0] sm:$0xff] %vm752, %v610
      %782 = vst.msk [vmem:[%s226 + $0xe8] sm:$0xff] %vm752, %v613
      %783 = vst.msk [vmem:[%s226 + $0xf0] sm:$0xff] %vm752, %v618
      %784 = vst.msk [vmem:[%s226 + $0xf8] sm:$0xff] %vm752, %v621
      %785 = vst.msk [vmem:[%s226 + $0x100] sm:$0xff] %vm752, %v626
      %786 = vst.msk [vmem:[%s226 + $0x108] sm:$0xff] %vm752, %v629
      %787 = vst.msk [vmem:[%s226 + $0x110] sm:$0xff] %vm752, %v634
      %788 = vst.msk [vmem:[%s226 + $0x118] sm:$0xff] %vm752, %v637
      %789 = vst.msk [vmem:[%s226 + $0x120] sm:$0xff] %vm752, %v642
      %790 = vst.msk [vmem:[%s226 + $0x128] sm:$0xff] %vm752, %v645
      %791 = vst.msk [vmem:[%s226 + $0x130] sm:$0xff] %vm752, %v650
      %792 = vst.msk [vmem:[%s226 + $0x138] sm:$0xff] %vm752, %v653
      %793 = vst.msk [vmem:[%s226 + $0x140] sm:$0xff] %vm752, %v658
      %794 = vst.msk [vmem:[%s226 + $0x148] sm:$0xff] %vm752, %v661
      %795 = vst.msk [vmem:[%s226 + $0x150] sm:$0xff] %vm752, %v666
      %796 = vst.msk [vmem:[%s226 + $0x158] sm:$0xff] %vm752, %v669
      %797 = vst.msk [vmem:[%s226 + $0x160] sm:$0xff] %vm752, %v674
      %798 = vst.msk [vmem:[%s226 + $0x168] sm:$0xff] %vm752, %v677
      %799 = vst.msk [vmem:[%s226 + $0x170] sm:$0xff] %vm752, %v682
      %800 = vst.msk [vmem:[%s226 + $0x178] sm:$0xff] %vm752, %v685
      %801 = vst.msk [vmem:[%s226 + $0x180] sm:$0xff] %vm752, %v690
      %802 = vst.msk [vmem:[%s226 + $0x188] sm:$0xff] %vm752, %v693
      %803 = vst.msk [vmem:[%s226 + $0x190] sm:$0xff] %vm752, %v698
      %804 = vst.msk [vmem:[%s226 + $0x198] sm:$0xff] %vm752, %v701
      %805 = vst.msk [vmem:[%s226 + $0x1a0] sm:$0xff] %vm752, %v706
      %806 = vst.msk [vmem:[%s226 + $0x1a8] sm:$0xff] %vm752, %v709
      %807 = vst.msk [vmem:[%s226 + $0x1b0] sm:$0xff] %vm752, %v714
      %808 = vst.msk [vmem:[%s226 + $0x1b8] sm:$0xff] %vm752, %v717
      %809 = vst.msk [vmem:[%s226 + $0x1c0] sm:$0xff] %vm752, %v722
      %810 = vst.msk [vmem:[%s226 + $0x1c8] sm:$0xff] %vm752, %v725
      %811 = vst.msk [vmem:[%s226 + $0x1d0] sm:$0xff] %vm752, %v730
      %812 = vst.msk [vmem:[%s226 + $0x1d8] sm:$0xff] %vm752, %v733
      %813 = vst.msk [vmem:[%s226 + $0x1e0] sm:$0xff] %vm752, %v738
      %814 = vst.msk [vmem:[%s226 + $0x1e8] sm:$0xff] %vm752, %v741
      %815 = vst.msk [vmem:[%s226 + $0x1f0] sm:$0xff] %vm752, %v746
      %816 = vst.msk [vmem:[%s226 + $0x1f8] sm:$0xff] %vm752, %v749
      %s817 = smul.u32 64, %s16
      %p818 = scmp.lt.s32.totalorder %s817, 255
      %s819 = scalar_select %p818, %s817, 255
      %s820 = smul.addr %s819, 8
      %s821 = scalar_lea.vmem %s5, %s820
      // Predicated region
      $region41: #{tpu_custom_call.1} parent=39 // pred_check
        %p822 = pneg %p144
      $region42: #{tpu_custom_call.1} parent=39 // pred_check_branch
        %824 = sbr.rel (%p822) target = $region44
      $region43: #{tpu_custom_call.1} parent=39 // pred_region
        %s825 = smul.u32 64, %s16
      $region44: #{tpu_custom_call.1} parent=39 // pred_fallthru
        _
    $region40: #{tpu_custom_call.1} parent=5 // pred_fallthru
      _
    %p826 = scmp.le.s32.totalorder 2, %s11
    // Predicated region
    $region45: #{tpu_custom_call.1} parent=5 // pred_check
      %p827 = pneg %p826
    $region46: #{tpu_custom_call.1} parent=5 // pred_check_branch
      %829 = sbr.rel (%p827) target = $region48
    $region47: #{tpu_custom_call.1} parent=5 // pred_region
      %s830 = ssub.s32 %s11, 2
      // Predicated region
      $region49: #{tpu_custom_call.1} parent=47 // pred_check
        %p831 = pneg %p150
      $region50: #{tpu_custom_call.1} parent=47 // pred_check_branch
        %833 = sbr.rel (%p831) target = $region52
      $region51: #{tpu_custom_call.1} parent=47 // pred_region
        %s834 = smul.u32 64, %s17
        %p835 = scmp.lt.s32.totalorder %s834, 255
        %s836 = scalar_select %p835, %s834, 255
        %s837 = smul.addr %s836, 8
        %s838 = scalar_lea.vmem %s5, %s837
      $region52: #{tpu_custom_call.1} parent=47 // pred_fallthru
        _
    $region48: #{tpu_custom_call.1} parent=5 // pred_fallthru
      _
  $region6: #{tpu_custom_call.1} parent=0 // loop_footer
    %s15 = sadd.s32 1, %s11
  $region7: #{tpu_custom_call.1} parent=0 // loop_footer_branch
    %10 = sbr.rel target = $region3
  $region8: #{tpu_custom_call.1} parent=0 // loop_exit
    _

</llo_original>
